<compile_context>
chip_gen: v7x
topology: tpu7x:2x2x1
jax: 0.10.0
libtpu: 0.0.40
codegen_flags: <defaults>
</compile_context>

<pallas_src>
import functools
import math

import jax
import jax.numpy as jnp
from jax.experimental import pallas as pl
from jax.experimental.pallas import tpu as pltpu


def _cdiv(a: int, b: int) -> int:
    return -(-a // b)


def _round_up(x: int, m: int) -> int:
    return ((x + m - 1) // m) * m


def _policy_loss_kernel(lp_ref, olp_ref, adv_ref, out_ref, *,
                        clip_eps: float, rows: int, block_rows: int,
                        lane_w: int, fold8: bool, needs_mask: bool):
    # Load in native dtype, upcast to f32 in-register (VPU/EUP have slack,
    # kernel is HBM-bound).
    lp = lp_ref[...].astype(jnp.float32)
    olp = olp_ref[...].astype(jnp.float32)
    adv = adv_ref[...].astype(jnp.float32)

    ratio = jnp.exp(lp - olp)
    surr1 = ratio * adv
    surr2 = jnp.clip(ratio, 1.0 - clip_eps, 1.0 + clip_eps) * adv
    clip_loss = jnp.minimum(surr1, surr2)

    if needs_mask:
        # Last grid block may extend past `rows`; zero out the OOB rows
        # (select -> garbage / NaN in the unselected branch cannot propagate).
        i = pl.program_id(0)
        row_ids = jax.lax.broadcasted_iota(jnp.int32, (block_rows, lane_w), 0)
        valid = row_ids < (rows - i * block_rows)
        clip_loss = jnp.where(valid, clip_loss, 0.0)

    if fold8:
        # (block_rows, W) -> (block_rows//8, 8, W); summing axis 0 is plain
        # vreg-wise VPU adds and the (8, W) store is unmasked & aligned.
        partial = jnp.sum(clip_loss.reshape(block_rows // 8, 8, lane_w), axis=0)
    else:
        # Tiny-input path (block_rows == rows < 8): one cross-sublane reduce.
        partial = jnp.sum(clip_loss, axis=0, keepdims=True)
    out_ref[...] = partial


def _pick_lane_width(n: int):
    for w in (512, 256, 128):
        if n % w == 0:
            return w, False
    return 128, True  # rare fallback: needs a small zero pad to a multiple of 128


def _policy_loss_impl(log_probs, old_log_probs, advantages, clip_eps: float = 0.2):
    """Returns scalar -mean(min(ratio*adv, clip(ratio)*adv)) as float32."""
    assert log_probs.shape == old_log_probs.shape == advantages.shape
    n = int(math.prod(log_probs.shape))
    assert n > 0

    W, needs_pad = _pick_lane_width(n)
    padded_n = _round_up(n, W) if needs_pad else n
    rows = padded_n // W

    # dtype-aware sublane packing: 8 rows for 4-byte, 16 for 2-byte, 32 for 1-byte.
    itemsize = jnp.dtype(log_probs.dtype).itemsize
    pack = max(8, 32 // max(1, itemsize))

    # Balanced block sizing; <= 2048 rows x 512 lanes (4 MiB f32 / input / step)
    # so double-buffered inputs (24 MiB) fit every generation incl. v7x (64 MiB VMEM).
    max_block_rows = 2048
    target_blocks = _cdiv(rows, max_block_rows)
    if rows >= 2 * pack:
        target_blocks = max(target_blocks, 2)   # keep both v7x TensorCores busy
    block_rows = _round_up(_cdiv(rows, target_blocks), pack)
    if block_rows >= rows:
        block_rows = rows                        # full-dim block (always legal)
    num_blocks = _cdiv(rows, block_rows)

    fold8 = (block_rows % 8 == 0)
    needs_mask = (rows % block_rows != 0)

    def prep(x):
        x = x.reshape(-1)                        # free: contiguous collapse
        if needs_pad:
            # TODO(synk): rare path (n % 128 != 0) still materializes a padded
            # copy; zero padding contributes exactly 0 to the clipped sum.
            x = jnp.pad(x, (0, padded_n - n))
        return x.reshape(rows, W)                # free bitcast when no pad

    in_spec = pl.BlockSpec((block_rows, W), lambda i: (i, 0))
    if fold8:
        out_shape = jax.ShapeDtypeStruct((num_blocks * 8, W), jnp.float32)
        out_spec = pl.BlockSpec((8, W), lambda i: (i, 0))
    else:
        out_shape = jax.ShapeDtypeStruct((num_blocks, W), jnp.float32)
        out_spec = pl.BlockSpec((1, W), lambda i: (i, 0))

    kernel = functools.partial(
        _policy_loss_kernel, clip_eps=float(clip_eps), rows=rows,
        block_rows=block_rows, lane_w=W, fold8=fold8, needs_mask=needs_mask)

    partials = pl.pallas_call(
        kernel,
        out_shape=out_shape,
        grid_spec=pltpu.PrefetchScalarGridSpec(
            num_scalar_prefetch=0,
            grid=(num_blocks,),
            in_specs=[in_spec, in_spec, in_spec],
            out_specs=out_spec,
        ),
        compiler_params=pltpu.CompilerParams(
            dimension_semantics=("parallel",),   # independent blocks -> megacore
            vmem_limit_bytes=48 * 1024 * 1024,   # needed on v5e; safe on v7x (64 MiB)
        ),
    )(prep(log_probs), prep(old_log_probs), prep(advantages))

    # Tiny final reduce / divide / negate (mean over the TRUE element count).
    return -(jnp.sum(partials) / jnp.float32(n))


# Single fused dispatch: prep reshapes + pallas_call + epilogue.
policy_loss = jax.jit(_policy_loss_impl, static_argnames=("clip_eps",))


def _reference(log_probs, old_log_probs, advantages, clip_eps=0.2):
    ratio = jnp.exp(log_probs - old_log_probs)
    surr1 = ratio * advantages
    surr2 = jnp.clip(ratio, 1.0 - clip_eps, 1.0 + clip_eps) * advantages
    return -jnp.mean(jnp.minimum(surr1, surr2))


if __name__ == "__main__":
    key = jax.random.PRNGKey(0)
    k1, k2, k3 = jax.random.split(key, 3)
    B, T = 16, 128  # small synthetic batch of (batch, seq) log-probs
    log_probs = jax.random.normal(k1, (B, T), jnp.float32) * 0.1 - 1.0
    old_log_probs = jax.random.normal(k2, (B, T), jnp.float32) * 0.1 - 1.0
    advantages = jax.random.normal(k3, (B, T), jnp.float32)

    loss = policy_loss(log_probs, old_log_probs, advantages, clip_eps=0.2)
    loss = jax.block_until_ready(loss)

    ref = _reference(log_probs, old_log_probs, advantages, clip_eps=0.2)
    assert jnp.allclose(loss, ref, rtol=1e-5, atol=1e-6), (loss, ref)
    print("KERNEL_OK")
</pallas_src>

<mosaic_0001>
module attributes {stable_mosaic.version = 11 : i64} {
  func.func @_policy_loss_kernel(%arg0: i32, %arg1: memref<4x512xf32, #tpu.memory_space<vmem>>, %arg2: memref<4x512xf32, #tpu.memory_space<vmem>>, %arg3: memref<4x512xf32, #tpu.memory_space<vmem>>, %arg4: memref<1x512xf32, #tpu.memory_space<vmem>>) attributes {dimension_semantics = [#tpu.dimension_semantics<parallel>], iteration_bounds = array<i64: 1>, scalar_prefetch = 0 : i64, scratch_operands = 0 : i64, tpu.core_type = #tpu.core_type<tc>, window_params = [{transform_indices = @transform_0, window_bounds = array<i64: 4, 512>}, {transform_indices = @transform_1, window_bounds = array<i64: 4, 512>}, {transform_indices = @transform_2, window_bounds = array<i64: 4, 512>}, {transform_indices = @transform_3, window_bounds = array<i64: 1, 512>}]} {
    %c0 = arith.constant 0 : index
    %c0_0 = arith.constant 0 : index
    %0 = vector.load %arg1[%c0, %c0_0] : memref<4x512xf32, #tpu.memory_space<vmem>>, vector<4x512xf32>
    %c0_1 = arith.constant 0 : index
    %c0_2 = arith.constant 0 : index
    %1 = vector.load %arg2[%c0_1, %c0_2] : memref<4x512xf32, #tpu.memory_space<vmem>>, vector<4x512xf32>
    %c0_3 = arith.constant 0 : index
    %c0_4 = arith.constant 0 : index
    %2 = vector.load %arg3[%c0_3, %c0_4] : memref<4x512xf32, #tpu.memory_space<vmem>>, vector<4x512xf32>
    %3 = arith.subf %0, %1 : vector<4x512xf32>
    %4 = math.exp %3 : vector<4x512xf32>
    %5 = arith.mulf %4, %2 : vector<4x512xf32>
    %cst = arith.constant 8.000000e-01 : f32
    %cst_5 = arith.constant 1.200000e+00 : f32
    %6 = vector.broadcast %cst : f32 to vector<4x512xf32>
    %7 = arith.maximumf %6, %4 : vector<4x512xf32>
    %8 = vector.broadcast %cst_5 : f32 to vector<4x512xf32>
    %9 = arith.minimumf %8, %7 : vector<4x512xf32>
    %10 = arith.mulf %9, %2 : vector<4x512xf32>
    %11 = arith.minimumf %5, %10 : vector<4x512xf32>
    %cst_6 = arith.constant dense<0.000000e+00> : vector<512xf32>
    %12 = vector.multi_reduction <add>, %11, %cst_6 [0] : vector<4x512xf32> to vector<512xf32>
    %13 = vector.shape_cast %12 : vector<512xf32> to vector<1x512xf32>
    %c0_7 = arith.constant 0 : index
    %c0_8 = arith.constant 0 : index
    %14 = vector.load %arg4[%c0_7, %c0_8] : memref<1x512xf32, #tpu.memory_space<vmem>>, vector<1x512xf32>
    tpu.vector_store %arg4[%c0_7, %c0_8], %13 {strides = array<i32>} : memref<1x512xf32, #tpu.memory_space<vmem>>, vector<1x512xf32>,
    return
  }
  func.func @transform_0(%arg0: i32) -> (i32, i32) {
    %c0_i32 = arith.constant 0 : i32
    %c0_i32_0 = arith.constant 0 : i32
    return %arg0, %c0_i32 : i32, i32
  }
  func.func @transform_1(%arg0: i32) -> (i32, i32) {
    %c0_i32 = arith.constant 0 : i32
    %c0_i32_0 = arith.constant 0 : i32
    return %arg0, %c0_i32 : i32, i32
  }
  func.func @transform_2(%arg0: i32) -> (i32, i32) {
    %c0_i32 = arith.constant 0 : i32
    %c0_i32_0 = arith.constant 0 : i32
    return %arg0, %c0_i32 : i32, i32
  }
  func.func @transform_3(%arg0: i32) -> (i32, i32) {
    %c0_i32 = arith.constant 0 : i32
    %c0_i32_0 = arith.constant 0 : i32
    return %arg0, %c0_i32 : i32, i32
  }
}

</mosaic_0001>

<llo_original>
// kernel: _policy_loss_impl.1
$region0: #{_policy_loss_impl.1}
  #allocation0 [shape = 'u32[]', space=smem, size = 0x4, offset = 0x4, fixed_abs, tag = 'smem constant byte address 0x4 - core index']
  #allocation1 [shape = 'u32[144,128]{1,0:T(1,128)}', space=vmem, size = 0x12000, scoped, tag = 'internal scratch']
  %s0 = inlined_call_operand.vmem [shape: f32[4,512], index: 0, kind: input, shape index: {}]
  %s1 = inlined_call_operand.vmem [shape: f32[4,512], index: 1, kind: input, shape index: {}]
  %s2 = inlined_call_operand.vmem [shape: f32[4,512], index: 2, kind: input, shape index: {}]
  %s3 = inlined_call_operand.vmem [shape: f32[1,512], index: 3, kind: output, shape index: {}]
  %s4 = sld [smem:[#allocation0]]
  $region22: #{_policy_loss_impl.1} parent=0
    _
  %s6 = ssub.s32 1, %s4
  %s7 = scalar_select 0, %s6, %s4
  // Predicated region
  $region2: #{_policy_loss_impl.1} parent=0 // pred_check
    _
  $region3: #{_policy_loss_impl.1} parent=0 // pred_check_branch
    %9 = sbr.rel (0) target = $region5
  $region4: #{_policy_loss_impl.1} parent=0 // pred_region
    _
  $region5: #{_policy_loss_impl.1} parent=0 // pred_fallthru
    _
  // Predicated region
  $region6: #{_policy_loss_impl.1} parent=0 // pred_check
    _
  $region7: #{_policy_loss_impl.1} parent=0 // pred_check_branch
    %11 = sbr.rel (0) target = $region9
  $region8: #{_policy_loss_impl.1} parent=0 // pred_region
    _
  $region9: #{_policy_loss_impl.1} parent=0 // pred_fallthru
    _
  // Predicated region
  $region10: #{_policy_loss_impl.1} parent=0 // pred_check
    _
  $region11: #{_policy_loss_impl.1} parent=0 // pred_check_branch
    %13 = sbr.rel (0) target = $region13
  $region12: #{_policy_loss_impl.1} parent=0 // pred_region
    _
  $region13: #{_policy_loss_impl.1} parent=0 // pred_fallthru
    _
  %v14 = vld [vmem:[%s0] sm:$0xff]
  %v15 = vld [vmem:[%s0 + $0x8] sm:$0xff]
  %v16 = vld [vmem:[%s1] sm:$0xff]
  %v17 = vld [vmem:[%s1 + $0x8] sm:$0xff]
  %v18 = vld [vmem:[%s2] sm:$0xff]
  %v19 = vld [vmem:[%s2 + $0x8] sm:$0xff]
  %v20 = vsub.f32 %v14, %v16
  %v21 = vsub.f32 %v15, %v17
  %v22 = vmul.f32 %v20, 1.442695
  %v23 = vpow.pop %v22
  %v24 = vmul.f32 %v21, 1.442695
  %v25 = vpow.pop %v24
  %v26 = vmul.f32 %v23, %v18
  %v27 = vmul.f32 %v25, %v19
  %v28 = vmax.f32 %v23, 0.8
  %v29 = vmax.f32 %v25, 0.8
  %v30 = vmin.f32 %v28, 1.2
  %v31 = vmin.f32 %v29, 1.2
  %v32 = vmul.f32 %v30, %v18
  %v33 = vmul.f32 %v31, %v19
  %v34 = vmin.f32 %v26, %v32
  %v35 = vmin.f32 %v27, %v33
  %v38 = vcombine.high %v34, %v34
  %v39 = vcombine.high %v35, %v35
  %vm42 = vcmask 1043456
  %v43 = vsel %vm42, %v34, 0.0
  %v44 = vrot.slane %v43, 4
  %v45 = vadd.f32 %v43, %v44
  %v46 = vrot.slane %v45, 2
  %v47 = vadd.f32 %v45, %v46
  %v48 = vrot.slane %v47, 1
  %v49 = vadd.f32 %v47, %v48
  %v50 = vsel %vm42, %v38, 0.0
  %v51 = vrot.slane %v50, 4
  %v52 = vadd.f32 %v50, %v51
  %v53 = vrot.slane %v52, 2
  %v54 = vadd.f32 %v52, %v53
  %v55 = vrot.slane %v54, 1
  %v56 = vadd.f32 %v54, %v55
  %v57 = vsel %vm42, %v35, 0.0
  %v58 = vrot.slane %v57, 4
  %v59 = vadd.f32 %v57, %v58
  %v60 = vrot.slane %v59, 2
  %v61 = vadd.f32 %v59, %v60
  %v62 = vrot.slane %v61, 1
  %v63 = vadd.f32 %v61, %v62
  %v64 = vsel %vm42, %v39, 0.0
  %v65 = vrot.slane %v64, 4
  %v66 = vadd.f32 %v64, %v65
  %v67 = vrot.slane %v66, 2
  %v68 = vadd.f32 %v66, %v67
  %v69 = vrot.slane %v68, 1
  %v70 = vadd.f32 %v68, %v69
  %v75 = vcombine.low %v49, %v56
  %v76 = vcombine.low %v63, %v70
  %v78 = vunpack.c.l.s4 1966171168
  %v79 = vunpack.c.0.s8 %v78
  %v80 = vlaneseq
  %v81 = vshrl.u32 %v80, 7
  %v82 = vsub.s32 %v79, %v81
  %v83 = vrot.slane %v75, %v82
  %v85 = vunpack.c.l.s4 1966171168
  %v86 = vunpack.c.0.s8 %v85
  %v87 = vlaneseq
  %v88 = vshrl.u32 %v87, 7
  %v89 = vsub.s32 %v86, %v88
  %v90 = vrot.slane %v76, %v89
  %v91 = vcombine.low %v83, %v90
  %v93 = vunpack.c.l.s4 1966171168
  %v94 = vunpack.c.0.s8 %v93
  %v95 = vlaneseq
  %v96 = vshrl.u32 %v95, 7
  %v97 = vsub.s32 %v94, %v96
  %v98 = vrot.slane %v91, %v97
  %v100 = vlaneseq
  %vm101 = vcmp.ge.s32.totalorder %v100, 0
  %vm102 = vcmp.lt.s32.totalorder %v100, 512
  %vm103 = vmand %vm101, %vm102
  %104 = vst.msk [vmem:[%s3] sm:$0xf] %vm103, %v98
  // Predicated region
  $region14: #{_policy_loss_impl.1} parent=0 // pred_check
    _
  $region15: #{_policy_loss_impl.1} parent=0 // pred_check_branch
    %106 = sbr.rel (0) target = $region17
  $region16: #{_policy_loss_impl.1} parent=0 // pred_region
    _
  $region17: #{_policy_loss_impl.1} parent=0 // pred_fallthru
    _
  // Predicated region
  $region18: #{_policy_loss_impl.1} parent=0 // pred_check
    _
  $region19: #{_policy_loss_impl.1} parent=0 // pred_check_branch
    %108 = sbr.rel (0) target = $region21
  $region20: #{_policy_loss_impl.1} parent=0 // pred_region
    _
  $region21: #{_policy_loss_impl.1} parent=0 // pred_fallthru
    _

</llo_original>
